<compile_context>
chip_gen: v6e
topology: v6e:2x2x1
jax: 0.10.0
libtpu: 0.0.40
codegen_flags: <defaults>
</compile_context>

<pallas_src>
import jax
import jax.numpy as jnp
from jax.experimental import pallas as pl
from jax.experimental.pallas import tpu as pltpu


# -----------------------------------------------------------------------------
# Helpers
# -----------------------------------------------------------------------------
def _round_up(x, m):
    return ((x + m - 1) // m) * m


def _cdiv(a, b):
    return (a + b - 1) // b


def _padded_bytes(shape, dtype):
    """Padded VMEM footprint of one block ((sublane, lane) tiling aware)."""
    itemsize = jnp.dtype(dtype).itemsize
    shape = tuple(shape)
    if len(shape) < 2:
        shape = (1,) * (2 - len(shape)) + shape
    lead = 1
    for d in shape[:-2]:
        lead *= d
    sub = 8 * max(1, 4 // itemsize)          # f32 -> 8 sublanes, bf16 -> 16
    return lead * _round_up(shape[-2], sub) * _round_up(shape[-1], 128) * itemsize


def _vmem_capacity_bytes():
    """Generation-aware VMEM capacity; conservative (v7x) fallback."""
    try:
        return int(pltpu.get_tpu_info().vmem_capacity_bytes)
    except Exception:
        return 64 << 20


def _compiler_params(semantics, blocks, extra_bytes=0):
    """dimension_semantics + vmem limit: pipelined blocks are double-buffered,
    intermediates / scratch (extra_bytes) are counted once (review #7)."""
    per_step = sum(_padded_bytes(s, d) for s, d in blocks)
    need = 2 * per_step + int(extra_bytes) + (4 << 20)
    cap = max(16 << 20, int(0.70 * _vmem_capacity_bytes()))
    limit = int(min(max(need, 32 << 20), cap))
    return pltpu.CompilerParams(dimension_semantics=tuple(semantics),
                                vmem_limit_bytes=limit)


# -----------------------------------------------------------------------------
# Kernel 1: PerResidueLDDTCaPredictor (LayerNorm -> Linear -> ReLU -> Linear ->
#           ReLU -> Linear) fused with compute_plddt.  Matmuls in bf16 with f32
#           MXU accumulation; *100 folded into the bin centers.
# -----------------------------------------------------------------------------
def plddt_head_kernel(s_ref, g_ref, be_ref,
                      w1_ref, b1_ref, w2_ref, b2_ref, w3_ref, b3_ref,
                      centers100_ref, plddt_ref):
    s = s_ref[...].astype(jnp.float32)                       # [T, c_s]
    mu = jnp.mean(s, axis=-1, keepdims=True)
    var = jnp.mean((s - mu) ** 2, axis=-1, keepdims=True)
    x = (s - mu) * jax.lax.rsqrt(var + 1e-5)
    x = x * g_ref[...] + be_ref[...]

    h = jnp.dot(x.astype(jnp.bfloat16), w1_ref[...],
                preferred_element_type=jnp.float32) + b1_ref[...]
    h = jnp.maximum(h, 0.0)
    h = jnp.dot(h.astype(jnp.bfloat16), w2_ref[...],
                preferred_element_type=jnp.float32) + b2_ref[...]
    h = jnp.maximum(h, 0.0)
    logits = jnp.dot(h.astype(jnp.bfloat16), w3_ref[...],
                     preferred_element_type=jnp.float32) + b3_ref[...]

    m = jnp.max(logits, axis=-1, keepdims=True)
    e = jnp.exp(logits - m)
    num = jnp.sum(e * centers100_ref[...], axis=-1, keepdims=True)
    den = jnp.sum(e, axis=-1, keepdims=True)                 # >= 1
    plddt_ref[...] = num * pl.reciprocal(den, approx=True)   # [T, 1]


# -----------------------------------------------------------------------------
# Kernel 2: fused TMScoreHead + compute_tm (ptm and iptm in one pass).
#   Grid = (row tiles [parallel], column tiles [arbitrary]).
#   Input layout is [rows, c_z, cols] so the per-row matmul
#       logits = W^T[nb, c_z] @ z_r[c_z, Tc]      (bf16, f32 accum)
#   keeps the columns on the 128 lanes: the exp / bin-contraction work is fully
#   lane-dense.  Per-row masked partial sums accumulate in VMEM scratch across
#   column tiles; only a tiny [Tr, 3] result per row tile is written to HBM.
# -----------------------------------------------------------------------------
def fused_pae_tm_kernel(z_ref, wt_ref, b_ref, f_ref,
                        arow_ref, acol_ref, cmask_ref,
                        out_ref, acc_p_ref, acc_in_ref, acc_id_ref):
    j = pl.program_id(1)
    nj = pl.num_programs(1)

    @pl.when(j == 0)
    def _init():
        acc_p_ref[...] = jnp.zeros_like(acc_p_ref)
        acc_in_ref[...] = jnp.zeros_like(acc_in_ref)
        acc_id_ref[...] = jnp.zeros_like(acc_id_ref)

    valid = cmask_ref[...]                                          # [1, Tc]
    # Interface mask built in-kernel from asym ids (no N x N mask in HBM).
    inter = jnp.where(arow_ref[...] != acol_ref[...], 1.0, 0.0) * valid  # [Tr, Tc]
    acc_id_ref[...] += inter

    wt = wt_ref[...]                                                # [nb, c_z] bf16
    bias = b_ref[...]                                               # [nb, 1]  f32
    f = f_ref[...]                                                  # [nb, 1]  f32

    tr = z_ref.shape[0]
    for r in range(tr):                                             # static unroll
        z_r = z_ref[r]                                              # [c_z, Tc] bf16
        logits = jnp.dot(wt, z_r,
                         preferred_element_type=jnp.float32) + bias  # [nb, Tc]
        m = jnp.max(logits, axis=0, keepdims=True)                  # [1, Tc]
        e = jnp.exp(logits - m)
        den = jnp.sum(e, axis=0, keepdims=True)                     # >= 1
        num = jnp.sum(e * f, axis=0, keepdims=True)
        tm = num * pl.reciprocal(den, approx=True)                  # [1, Tc]
        acc_p_ref[r:r + 1, :] += tm * valid
        acc_in_ref[r:r + 1, :] += tm * inter[r:r + 1, :]

    @pl.when(j == nj - 1)
    def _fin():
        out_ref[:, 0:1] = jnp.sum(acc_p_ref[...], axis=1, keepdims=True)
        out_ref[:, 1:2] = jnp.sum(acc_in_ref[...], axis=1, keepdims=True)
        out_ref[:, 2:3] = jnp.sum(acc_id_ref[...], axis=1, keepdims=True)


# -----------------------------------------------------------------------------
# Model wrapper
# -----------------------------------------------------------------------------
class AlphaFoldMultimerPallas:
    """Pallas re-implementation of AlphaFold_Multimer.forward_testing heads."""

    def __init__(self, c_s=32, c_z=16, c_hidden=32, plddt_bins=50,
                 tm_bins=64, tm_max_bin=31, seed=0):
        self.c_s, self.c_z, self.c_h = c_s, c_z, c_hidden
        self.plddt_bins, self.tm_bins, self.tm_max_bin = plddt_bins, tm_bins, tm_max_bin

        key = jax.random.PRNGKey(seed)
        ks = jax.random.split(key, 4)

        def lin(k, fan_in, fan_out):
            return (jax.random.normal(k, (fan_in, fan_out), jnp.float32)
                    * (1.0 / jnp.sqrt(fan_in)))

        # PerResidueLDDTCaPredictor params (f32 masters + bf16 kernel copies)
        self.ln_g = jnp.ones((1, c_s), jnp.float32)
        self.ln_b = jnp.zeros((1, c_s), jnp.float32)
        self.w1 = lin(ks[0], c_s, c_hidden)
        self.b1 = jnp.zeros((1, c_hidden), jnp.float32)
        self.w2 = lin(ks[1], c_hidden, c_hidden)
        self.b2 = jnp.zeros((1, c_hidden), jnp.float32)
        self.w3 = lin(ks[2], c_hidden, plddt_bins)
        self.b3 = jnp.zeros((1, plddt_bins), jnp.float32)
        self.w1_bf = self.w1.astype(jnp.bfloat16)
        self.w2_bf = self.w2.astype(jnp.bfloat16)
        self.w3_bf = self.w3.astype(jnp.bfloat16)

        # plddt bin centers (the *100 of compute_plddt is folded in — review #9)
        step = 1.0 / plddt_bins
        bounds = jnp.arange(plddt_bins, dtype=jnp.float32) * step
        self.plddt_centers = (bounds + 0.5 * step).reshape(1, plddt_bins)
        self.plddt_centers_x100 = self.plddt_centers * 100.0

        # TMScoreHead params.  The kernel reads the transposed weight [nb, c_z]
        # in bf16 (f32 MXU accumulation).  NOTE: bf16 introduces O(1e-3..1e-2)
        # relative error in the PAE logits vs. the f32 PyTorch head; the demo
        # validates against the true f32 reference within loose tolerances.
        self.tm_w = lin(ks[3], c_z, tm_bins)
        self.tm_wt_bf = jnp.transpose(self.tm_w).astype(jnp.bfloat16)   # [nb, c_z]
        self.tm_b = jnp.zeros((1, tm_bins), jnp.float32)
        self.tm_b_col = jnp.transpose(self.tm_b)                        # [nb, 1]

        # PAE bin centers (OpenFold _calculate_bin_centers)
        boundaries = jnp.linspace(0.0, float(tm_max_bin), tm_bins - 1)
        bstep = boundaries[1] - boundaries[0]
        centers = boundaries + bstep / 2.0
        self.pae_centers = jnp.concatenate([centers, centers[-1:] + bstep])  # [nb]

    # ---- plddt head ---------------------------------------------------------
    def plddt_head(self, single):
        n, c_s = single.shape
        # Tiles up to 1024 rows, but capped at ceil(n/2) so there are >= 2
        # "parallel" grid steps whenever n > 8 (v7x dual TensorCore, review #6).
        tile = int(min(1024, max(8, _round_up(_cdiv(n, 2), 8))))
        n_pad = _round_up(n, tile)
        s = jnp.pad(single.astype(jnp.float32), ((0, n_pad - n), (0, 0)))

        full = lambda shape: pl.BlockSpec(shape, lambda i: (0, 0))
        in_specs = [
            pl.BlockSpec((tile, c_s), lambda i: (i, 0)),
            full((1, c_s)), full((1, c_s)),
            full((c_s, self.c_h)), full((1, self.c_h)),
            full((self.c_h, self.c_h)), full((1, self.c_h)),
            full((self.c_h, self.plddt_bins)), full((1, self.plddt_bins)),
            full((1, self.plddt_bins)),
        ]
        out_spec = pl.BlockSpec((tile, 1), lambda i: (i, 0))

        blocks = [((tile, c_s), jnp.float32),
                  ((c_s, self.c_h), jnp.bfloat16),
                  ((self.c_h, self.c_h), jnp.bfloat16),
                  ((self.c_h, self.plddt_bins), jnp.bfloat16),
                  ((tile, 1), jnp.float32)]
        extra = 4 * tile * _round_up(self.plddt_bins, 128) * 4

        out = pl.pallas_call(
            plddt_head_kernel,
            out_shape=jax.ShapeDtypeStruct((n_pad, 1), jnp.float32),
            grid=(n_pad // tile,),
            in_specs=in_specs,
            out_specs=out_spec,
            compiler_params=_compiler_params(("parallel",), blocks, extra),
        )(s, self.ln_g, self.ln_b, self.w1_bf, self.b1, self.w2_bf, self.b2,
          self.w3_bf, self.b3, self.plddt_centers_x100)
        return out[:n, 0]

    # ---- fused pTM / ipTM ---------------------------------------------------
    def tm_scores(self, pair, asym_id):
        n = pair.shape[0]
        c_z, nb = self.c_z, self.tm_bins

        # Column (lane) tiling: columns padded to a multiple of 128, column tile
        # is the largest divisor of the padded width from {1024,512,256,128}.
        ncp = _round_up(n, 128)
        tc = next(c for c in (1024, 512, 256, 128) if ncp % c == 0)
        # Row tile: 8 rows per block (leading dim, no (8,128) constraint on the
        # z block; multiple of 8 for the [Tr, 3] output / accumulators).
        tr = 8
        nrp = _round_up(n, tr)

        # Lane-dense layout: rows leading, c_z on sublanes, columns on lanes.
        z_t = jnp.transpose(pair, (0, 2, 1)).astype(jnp.bfloat16)   # [n, c_z, n]
        z = jnp.pad(z_t, ((0, nrp - n), (0, 0), (0, ncp - n)))

        asym = asym_id.astype(jnp.int32)
        arow = jnp.pad(asym, (0, nrp - n), constant_values=-1).reshape(nrp, 1)
        acol = jnp.pad(asym, (0, ncp - n), constant_values=-2).reshape(1, ncp)
        cmask = (jnp.arange(ncp, dtype=jnp.int32) < n).astype(jnp.float32).reshape(1, ncp)

        clipped_n = max(n, 19)                        # residue_weights are all ones
        d0 = 1.24 * (clipped_n - 15.0) ** (1.0 / 3.0) - 1.8
        f = (1.0 / (1.0 + (self.pae_centers / d0) ** 2)).reshape(nb, 1).astype(jnp.float32)

        grid = (nrp // tr, ncp // tc)
        in_specs = [
            pl.BlockSpec((tr, c_z, tc), lambda i, j: (i, 0, j)),
            pl.BlockSpec((nb, c_z), lambda i, j: (0, 0)),
            pl.BlockSpec((nb, 1), lambda i, j: (0, 0)),
            pl.BlockSpec((nb, 1), lambda i, j: (0, 0)),
            pl.BlockSpec((tr, 1), lambda i, j: (i, 0)),
            pl.BlockSpec((1, tc), lambda i, j: (0, j)),
            pl.BlockSpec((1, tc), lambda i, j: (0, j)),
        ]
        out_spec = pl.BlockSpec((tr, 3), lambda i, j: (i, 0))

        blocks = [((tr, c_z, tc), jnp.bfloat16), ((nb, c_z), jnp.bfloat16),
                  ((nb, 1), jnp.float32), ((nb, 1), jnp.float32),
                  ((tr, 1), jnp.int32), ((1, tc), jnp.int32),
                  ((1, tc), jnp.float32), ((tr, 3), jnp.float32)]
        extra = (3 * _round_up(tr, 8) * _round_up(tc, 128) * 4      # scratch accs
                 + 4 * nb * _round_up(tc, 128) * 4)                 # logits/exp temps

        # NOTE(v5e): if profiling shows exposed DMA on the z stream, switch the
        # first in_spec to pipeline_mode=pl.Buffered(3).
        out = pl.pallas_call(
            fused_pae_tm_kernel,
            out_shape=jax.ShapeDtypeStruct((nrp, 3), jnp.float32),
            grid=grid,
            in_specs=in_specs,
            out_specs=out_spec,
            scratch_shapes=[pltpu.VMEM((tr, tc), jnp.float32),
                            pltpu.VMEM((tr, tc), jnp.float32),
                            pltpu.VMEM((tr, tc), jnp.float32)],
            compiler_params=_compiler_params(("parallel", "arbitrary"),
                                             blocks, extra),
        )(z, self.tm_wt_bf, self.tm_b_col, f, arow, acol, cmask)

        sums = out[:n]
        per_ptm = sums[:, 0] / (1e-8 + float(n))        # ptm denom hoisted (review #9)
        per_iptm = sums[:, 1] / (1e-8 + sums[:, 2])     # == 0 for single-chain inputs
        return jnp.max(per_ptm), jnp.max(per_iptm)

    # ---- forward (testing path) ---------------------------------------------
    def forward_testing(self, pair, single, aatype, protein_test):
        # TODO(synk): self.kd_blocks(...) and self.structure_module(...) are
        #             undefined in the reference source; `single` / `pair` are
        #             used directly as the structure-module single/pair outputs.
        plddt = self.plddt_head(single)
        ptm, iptm = self.tm_scores(pair, protein_test['chain_idx'])
        docking_score = ptm * 0.2 + iptm * 0.8
        positions = None  # TODO(synk): requires the StructureModule (IPA) stack.
        return positions, plddt, docking_score


# -----------------------------------------------------------------------------
# Pure-JAX f32 reference (true reference, no bf16 casts)
# -----------------------------------------------------------------------------
def _reference(model, pair, single, asym_id):
    s = single.astype(jnp.float32)
    mu = s.mean(-1, keepdims=True)
    var = ((s - mu) ** 2).mean(-1, keepdims=True)
    x = (s - mu) / jnp.sqrt(var + 1e-5) * model.ln_g + model.ln_b
    h = jax.nn.relu(x @ model.w1 + model.b1)
    h = jax.nn.relu(h @ model.w2 + model.b2)
    lg = h @ model.w3 + model.b3
    probs = jax.nn.softmax(lg, axis=-1)
    plddt = (probs * model.plddt_centers).sum(-1) * 100.0

    n = pair.shape[0]
    logits = pair.astype(jnp.float32) @ model.tm_w + model.tm_b
    clipped = max(n, 19)
    d0 = 1.24 * (clipped - 15.0) ** (1.0 / 3.0) - 1.8
    f = 1.0 / (1.0 + (model.pae_centers / d0) ** 2)
    p = jax.nn.softmax(logits, axis=-1)
    tm_term = (p * f).sum(-1)

    per_ptm = tm_term.sum(-1) / (1e-8 + n)
    ptm = per_ptm.max()
    inter = (asym_id[:, None] != asym_id[None, :]).astype(jnp.float32)
    per_iptm = (tm_term * inter).sum(-1) / (1e-8 + inter.sum(-1))
    iptm = per_iptm.max()
    return plddt, ptm, iptm


# -----------------------------------------------------------------------------
# Demo
# -----------------------------------------------------------------------------
if __name__ == "__main__":
    import numpy as np

    N, C_S, C_Z = 16, 32, 16            # 2 chains of 8 residues
    key = jax.random.PRNGKey(0)
    k1, k2, k3 = jax.random.split(key, 3)

    single = jax.random.normal(k1, (N, C_S), jnp.float32)
    pair = jax.random.normal(k2, (N, N, C_Z), jnp.float32)
    aatype = jax.random.randint(k3, (N,), 0, 20)
    chain_idx = jnp.concatenate([jnp.zeros((N // 2,), jnp.int32),
                                 jnp.ones((N // 2,), jnp.int32)])
    protein_test = {'chain_idx': chain_idx,
                    'target': jnp.zeros((N,), jnp.float32)}

    model = AlphaFoldMultimerPallas(c_s=C_S, c_z=C_Z)
    positions, plddt, docking_score = model.forward_testing(
        pair, single, aatype, protein_test)

    jax.block_until_ready(plddt)
    jax.block_until_ready(docking_score)

    # Correctness check against the true f32 reference (kernel uses bf16 MXU
    # inputs -> small, documented tolerance on the confidence scores).
    plddt_ref, ptm_ref, iptm_ref = _reference(model, pair, single, chain_idx)
    dock_ref = ptm_ref * 0.2 + iptm_ref * 0.8
    np.testing.assert_allclose(np.asarray(plddt), np.asarray(plddt_ref),
                               rtol=2e-2, atol=1.0)
    np.testing.assert_allclose(float(docking_score), float(dock_ref),
                               rtol=3e-2, atol=2e-3)

    assert plddt.shape == (N,)
    assert bool(jnp.all(jnp.isfinite(plddt)))
    assert bool(jnp.isfinite(docking_score))

    print("KERNEL_OK")
</pallas_src>

<mosaic_0001>
module attributes {stable_mosaic.version = 11 : i64} {
  func.func @plddt_head_kernel(%arg0: i32, %arg1: memref<8x32xf32, #tpu.memory_space<vmem>>, %arg2: memref<1x32xf32, #tpu.memory_space<vmem>>, %arg3: memref<1x32xf32, #tpu.memory_space<vmem>>, %arg4: memref<32x32xbf16, #tpu.memory_space<vmem>>, %arg5: memref<1x32xf32, #tpu.memory_space<vmem>>, %arg6: memref<32x32xbf16, #tpu.memory_space<vmem>>, %arg7: memref<1x32xf32, #tpu.memory_space<vmem>>, %arg8: memref<32x50xbf16, #tpu.memory_space<vmem>>, %arg9: memref<1x50xf32, #tpu.memory_space<vmem>>, %arg10: memref<1x50xf32, #tpu.memory_space<vmem>>, %arg11: memref<8x1xf32, #tpu.memory_space<vmem>>) attributes {dimension_semantics = [#tpu.dimension_semantics<parallel>], iteration_bounds = array<i64: 2>, scalar_prefetch = 0 : i64, scratch_operands = 0 : i64, tpu.core_type = #tpu.core_type<tc>, window_params = [{transform_indices = @transform_0, window_bounds = array<i64: 8, 32>}, {pipeline_mode = #tpu.pipeline_mode<synchronous>, transform_indices = @transform_1, window_bounds = array<i64: 1, 32>}, {pipeline_mode = #tpu.pipeline_mode<synchronous>, transform_indices = @transform_2, window_bounds = array<i64: 1, 32>}, {pipeline_mode = #tpu.pipeline_mode<synchronous>, transform_indices = @transform_3, window_bounds = array<i64: 32, 32>}, {pipeline_mode = #tpu.pipeline_mode<synchronous>, transform_indices = @transform_4, window_bounds = array<i64: 1, 32>}, {pipeline_mode = #tpu.pipeline_mode<synchronous>, transform_indices = @transform_5, window_bounds = array<i64: 32, 32>}, {pipeline_mode = #tpu.pipeline_mode<synchronous>, transform_indices = @transform_6, window_bounds = array<i64: 1, 32>}, {pipeline_mode = #tpu.pipeline_mode<synchronous>, transform_indices = @transform_7, window_bounds = array<i64: 32, 50>}, {pipeline_mode = #tpu.pipeline_mode<synchronous>, transform_indices = @transform_8, window_bounds = array<i64: 1, 50>}, {pipeline_mode = #tpu.pipeline_mode<synchronous>, transform_indices = @transform_9, window_bounds = array<i64: 1, 50>}, {transform_indices = @transform_10, window_bounds = array<i64: 8, 1>}]} {
    %c0 = arith.constant 0 : index
    %c0_0 = arith.constant 0 : index
    %0 = vector.load %arg1[%c0, %c0_0] : memref<8x32xf32, #tpu.memory_space<vmem>>, vector<8x32xf32>
    %cst = arith.constant dense<0.000000e+00> : vector<8xf32>
    %1 = vector.multi_reduction <add>, %0, %cst [1] : vector<8x32xf32> to vector<8xf32>
    %2 = vector.shape_cast %1 : vector<8xf32> to vector<8x1xf32>
    %cst_1 = arith.constant 3.200000e+01 : f32
    %3 = vector.broadcast %cst_1 : f32 to vector<8x1xf32>
    %4 = arith.divf %2, %3 : vector<8x1xf32>
    %5 = vector.broadcast %4 : vector<8x1xf32> to vector<8x32xf32>
    %6 = arith.subf %0, %5 : vector<8x32xf32>
    %7 = arith.mulf %6, %6 : vector<8x32xf32>
    %cst_2 = arith.constant dense<0.000000e+00> : vector<8xf32>
    %8 = vector.multi_reduction <add>, %7, %cst_2 [1] : vector<8x32xf32> to vector<8xf32>
    %9 = vector.shape_cast %8 : vector<8xf32> to vector<8x1xf32>
    %cst_3 = arith.constant 3.200000e+01 : f32
    %10 = vector.broadcast %cst_3 : f32 to vector<8x1xf32>
    %11 = arith.divf %9, %10 : vector<8x1xf32>
    %12 = vector.broadcast %4 : vector<8x1xf32> to vector<8x32xf32>
    %13 = arith.subf %0, %12 : vector<8x32xf32>
    %cst_4 = arith.constant 9.99999974E-6 : f32
    %14 = vector.broadcast %cst_4 : f32 to vector<8x1xf32>
    %15 = arith.addf %11, %14 : vector<8x1xf32>
    %16 = math.rsqrt %15 : vector<8x1xf32>
    %17 = vector.broadcast %16 : vector<8x1xf32> to vector<8x32xf32>
    %18 = arith.mulf %13, %17 : vector<8x32xf32>
    %c0_5 = arith.constant 0 : index
    %c0_6 = arith.constant 0 : index
    %19 = vector.load %arg2[%c0_5, %c0_6] : memref<1x32xf32, #tpu.memory_space<vmem>>, vector<1x32xf32>
    %20 = vector.broadcast %19 : vector<1x32xf32> to vector<8x32xf32>
    %21 = arith.mulf %18, %20 : vector<8x32xf32>
    %c0_7 = arith.constant 0 : index
    %c0_8 = arith.constant 0 : index
    %22 = vector.load %arg3[%c0_7, %c0_8] : memref<1x32xf32, #tpu.memory_space<vmem>>, vector<1x32xf32>
    %23 = vector.broadcast %22 : vector<1x32xf32> to vector<8x32xf32>
    %24 = arith.addf %21, %23 : vector<8x32xf32>
    %25 = arith.truncf %24 : vector<8x32xf32> to vector<8x32xbf16>
    %c0_9 = arith.constant 0 : index
    %c0_10 = arith.constant 0 : index
    %26 = vector.load %arg4[%c0_9, %c0_10] : memref<32x32xbf16, #tpu.memory_space<vmem>>, vector<32x32xbf16>
    %cst_11 = arith.constant dense<0.000000e+00> : vector<8x32xf32>
    %27 = tpu.matmul %25, %26, %cst_11 {dimension_numbers = #tpu.dot_dimension_numbers<[1], [0], [0], [1], [0, 0, 1, 1], [], []>} : vector<8x32xbf16>, vector<32x32xbf16>, vector<8x32xf32> -> vector<8x32xf32>
    %c0_12 = arith.constant 0 : index
    %c0_13 = arith.constant 0 : index
    %28 = vector.load %arg5[%c0_12, %c0_13] : memref<1x32xf32, #tpu.memory_space<vmem>>, vector<1x32xf32>
    %29 = vector.broadcast %28 : vector<1x32xf32> to vector<8x32xf32>
    %30 = arith.addf %27, %29 : vector<8x32xf32>
    %cst_14 = arith.constant 0.000000e+00 : f32
    %31 = vector.broadcast %cst_14 : f32 to vector<8x32xf32>
    %32 = arith.maximumf %30, %31 : vector<8x32xf32>
    %33 = arith.truncf %32 : vector<8x32xf32> to vector<8x32xbf16>
    %c0_15 = arith.constant 0 : index
    %c0_16 = arith.constant 0 : index
    %34 = vector.load %arg6[%c0_15, %c0_16] : memref<32x32xbf16, #tpu.memory_space<vmem>>, vector<32x32xbf16>
    %cst_17 = arith.constant dense<0.000000e+00> : vector<8x32xf32>
    %35 = tpu.matmul %33, %34, %cst_17 {dimension_numbers = #tpu.dot_dimension_numbers<[1], [0], [0], [1], [0, 0, 1, 1], [], []>} : vector<8x32xbf16>, vector<32x32xbf16>, vector<8x32xf32> -> vector<8x32xf32>
    %c0_18 = arith.constant 0 : index
    %c0_19 = arith.constant 0 : index
    %36 = vector.load %arg7[%c0_18, %c0_19] : memref<1x32xf32, #tpu.memory_space<vmem>>, vector<1x32xf32>
    %37 = vector.broadcast %36 : vector<1x32xf32> to vector<8x32xf32>
    %38 = arith.addf %35, %37 : vector<8x32xf32>
    %cst_20 = arith.constant 0.000000e+00 : f32
    %39 = vector.broadcast %cst_20 : f32 to vector<8x32xf32>
    %40 = arith.maximumf %38, %39 : vector<8x32xf32>
    %41 = arith.truncf %40 : vector<8x32xf32> to vector<8x32xbf16>
    %c0_21 = arith.constant 0 : index
    %c0_22 = arith.constant 0 : index
    %42 = vector.load %arg8[%c0_21, %c0_22] : memref<32x50xbf16, #tpu.memory_space<vmem>>, vector<32x50xbf16>
    %cst_23 = arith.constant dense<0.000000e+00> : vector<8x50xf32>
    %43 = tpu.matmul %41, %42, %cst_23 {dimension_numbers = #tpu.dot_dimension_numbers<[1], [0], [0], [1], [0, 0, 1, 1], [], []>} : vector<8x32xbf16>, vector<32x50xbf16>, vector<8x50xf32> -> vector<8x50xf32>
    %c0_24 = arith.constant 0 : index
    %c0_25 = arith.constant 0 : index
    %44 = vector.load %arg9[%c0_24, %c0_25] : memref<1x50xf32, #tpu.memory_space<vmem>>, vector<1x50xf32>
    %45 = vector.broadcast %44 : vector<1x50xf32> to vector<8x50xf32>
    %46 = arith.addf %43, %45 : vector<8x50xf32>
    %cst_26 = arith.constant dense<0xFF800000> : vector<8xf32>
    %47 = vector.multi_reduction <maximumf>, %46, %cst_26 [1] : vector<8x50xf32> to vector<8xf32>
    %48 = vector.shape_cast %47 : vector<8xf32> to vector<8x1xf32>
    %49 = vector.broadcast %48 : vector<8x1xf32> to vector<8x50xf32>
    %50 = arith.subf %46, %49 : vector<8x50xf32>
    %51 = math.exp %50 : vector<8x50xf32>
    %c0_27 = arith.constant 0 : index
    %c0_28 = arith.constant 0 : index
    %52 = vector.load %arg10[%c0_27, %c0_28] : memref<1x50xf32, #tpu.memory_space<vmem>>, vector<1x50xf32>
    %53 = vector.broadcast %52 : vector<1x50xf32> to vector<8x50xf32>
    %54 = arith.mulf %51, %53 : vector<8x50xf32>
    %cst_29 = arith.constant dense<0.000000e+00> : vector<8xf32>
    %55 = vector.multi_reduction <add>, %54, %cst_29 [1] : vector<8x50xf32> to vector<8xf32>
    %56 = vector.shape_cast %55 : vector<8xf32> to vector<8x1xf32>
    %cst_30 = arith.constant dense<0.000000e+00> : vector<8xf32>
    %57 = vector.multi_reduction <add>, %51, %cst_30 [1] : vector<8x50xf32> to vector<8xf32>
    %58 = vector.shape_cast %57 : vector<8xf32> to vector<8x1xf32>
    %59 = tpu.reciprocal %58 {approx = true} : vector<8x1xf32> -> vector<8x1xf32>
    %60 = arith.mulf %56, %59 : vector<8x1xf32>
    %c0_31 = arith.constant 0 : index
    %c0_32 = arith.constant 0 : index
    %61 = vector.load %arg11[%c0_31, %c0_32] : memref<8x1xf32, #tpu.memory_space<vmem>>, vector<8x1xf32>
    tpu.vector_store %arg11[%c0_31, %c0_32], %60 {strides = array<i32>} : memref<8x1xf32, #tpu.memory_space<vmem>>, vector<8x1xf32>,
    return
  }
  func.func @transform_0(%arg0: i32) -> (i32, i32) {
    %c0_i32 = arith.constant 0 : i32
    %c0_i32_0 = arith.constant 0 : i32
    return %arg0, %c0_i32 : i32, i32
  }
  func.func @transform_1(%arg0: i32) -> (i32, i32) {
    %c0_i32 = arith.constant 0 : i32
    %c0_i32_0 = arith.constant 0 : i32
    %c0_i32_1 = arith.constant 0 : i32
    return %c0_i32, %c0_i32_0 : i32, i32
  }
  func.func @transform_2(%arg0: i32) -> (i32, i32) {
    %c0_i32 = arith.constant 0 : i32
    %c0_i32_0 = arith.constant 0 : i32
    %c0_i32_1 = arith.constant 0 : i32
    return %c0_i32, %c0_i32_0 : i32, i32
  }
  func.func @transform_3(%arg0: i32) -> (i32, i32) {
    %c0_i32 = arith.constant 0 : i32
    %c0_i32_0 = arith.constant 0 : i32
    %c0_i32_1 = arith.constant 0 : i32
    return %c0_i32, %c0_i32_0 : i32, i32
  }
  func.func @transform_4(%arg0: i32) -> (i32, i32) {
    %c0_i32 = arith.constant 0 : i32
    %c0_i32_0 = arith.constant 0 : i32
    %c0_i32_1 = arith.constant 0 : i32
    return %c0_i32, %c0_i32_0 : i32, i32
  }
  func.func @transform_5(%arg0: i32) -> (i32, i32) {
    %c0_i32 = arith.constant 0 : i32
    %c0_i32_0 = arith.constant 0 : i32
    %c0_i32_1 = arith.constant 0 : i32
    return %c0_i32, %c0_i32_0 : i32, i32
  }
  func.func @transform_6(%arg0: i32) -> (i32, i32) {
    %c0_i32 = arith.constant 0 : i32
    %c0_i32_0 = arith.constant 0 : i32
    %c0_i32_1 = arith.constant 0 : i32
    return %c0_i32, %c0_i32_0 : i32, i32
  }
  func.func @transform_7(%arg0: i32) -> (i32, i32) {
    %c0_i32 = arith.constant 0 : i32
    %c0_i32_0 = arith.constant 0 : i32
    %c0_i32_1 = arith.constant 0 : i32
    return %c0_i32, %c0_i32_0 : i32, i32
  }
  func.func @transform_8(%arg0: i32) -> (i32, i32) {
    %c0_i32 = arith.constant 0 : i32
    %c0_i32_0 = arith.constant 0 : i32
    %c0_i32_1 = arith.constant 0 : i32
    return %c0_i32, %c0_i32_0 : i32, i32
  }
  func.func @transform_9(%arg0: i32) -> (i32, i32) {
    %c0_i32 = arith.constant 0 : i32
    %c0_i32_0 = arith.constant 0 : i32
    %c0_i32_1 = arith.constant 0 : i32
    return %c0_i32, %c0_i32_0 : i32, i32
  }
  func.func @transform_10(%arg0: i32) -> (i32, i32) {
    %c0_i32 = arith.constant 0 : i32
    %c0_i32_0 = arith.constant 0 : i32
    return %arg0, %c0_i32 : i32, i32
  }
}

</mosaic_0001>

<llo_original>
// kernel: tpu_custom_call.1
$region0: #{tpu_custom_call.1}
  #allocation0 [shape = 'u32[]', space=smem, size = 0x4, offset = 0x4, fixed_abs, tag = 'smem constant byte address 0x4 - core index']
  #allocation1 [shape = 'u32[144,128]{1,0:T(1,128)}', space=vmem, size = 0x12000, scoped, tag = 'internal scratch']
  %s0 = inlined_call_operand.hbm [shape: f32[16,32], index: 0, kind: input, shape index: {}]
  %s1 = inlined_call_operand.vmem [shape: f32[1,32], index: 1, kind: input, shape index: {}]
  %s2 = inlined_call_operand.vmem [shape: f32[1,32], index: 2, kind: input, shape index: {}]
  %s3 = inlined_call_operand.hbm [shape: bf16[32,32], index: 3, kind: input, shape index: {}]
  %s4 = inlined_call_operand.vmem [shape: f32[1,32], index: 4, kind: input, shape index: {}]
  %s5 = inlined_call_operand.hbm [shape: bf16[32,32], index: 5, kind: input, shape index: {}]
  %s6 = inlined_call_operand.vmem [shape: f32[1,32], index: 6, kind: input, shape index: {}]
  %s7 = inlined_call_operand.hbm [shape: bf16[32,50], index: 7, kind: input, shape index: {}]
  %s8 = inlined_call_operand.vmem [shape: f32[1,50], index: 8, kind: input, shape index: {}]
  %s9 = inlined_call_operand.vmem [shape: f32[1,50], index: 9, kind: input, shape index: {}]
  %s10 = inlined_call_operand.vmem [shape: f32[16,1], index: 10, kind: output, shape index: {}]
  %s11 = sld [smem:[#allocation0]]
  $region89: #{tpu_custom_call.1} parent=0
    _
  %s13 = ssub.s32 1, %s11
  %s14 = scalar_select 0, %s13, %s11
  $region1: #{tpu_custom_call.1} parent=0
    #allocation2 [shape = 'u8[8192]{0}', space=vmem, size = 0x2000, scoped, tag = 'input window, operand 0']
    #allocation3 [shape = 's32[2]{0}', space=sflag, size = 0x8, scoped, tag = 'scoped memory for tpu_custom_call.1']
    #allocation4 [shape = 'u8[8192]{0}', space=vmem, size = 0x2000, scoped, tag = 'input window, operand 3, single buffered']
    #allocation5 [shape = 's32[1]{0}', space=sflag, size = 0x4, scoped, tag = 'scoped memory for tpu_custom_call.1']
    #allocation6 [shape = 'u8[8192]{0}', space=vmem, size = 0x2000, scoped, tag = 'input window, operand 5, single buffered']
    #allocation7 [shape = 'u8[8192]{0}', space=vmem, size = 0x2000, scoped, tag = 'input window, operand 7, single buffered']
    #allocation8 [shape = 's32[1]{0}', space=sflag, size = 0x4, scoped, tag = 'scoped memory for tpu_custom_call.1']
    %15 = vsyncpa [#allocation3], 0
    %s16 = scalar_lea.sflag [#allocation3], 1
    %17 = vsyncpa %s16, 0
    %18 = vsyncpa [#allocation5], 0
    %19 = vsyncpa [#allocation8], 0
    loop: start=0, step=1, limit=4
    $region2: #{tpu_custom_call.1} parent=1 // loop_pre_header
      _
    $region3: #{tpu_custom_call.1} parent=1 // loop_header
      %s21 = sphi 0, %s25
      %p22 = scmp.ge.s32.totalorder %s21, 4
      %s31 = sphi 0, %s33
      %s34 = sphi 0, %s31
      %s35 = sphi 0, %s34
      %s51 = sphi 0, %s35
      %s55 = sphi 0, %s55
      %s57 = sphi 0, %s55
      %s58 = sphi 0, %s57
      %s72 = sphi 0, %s58
      %s76 = sphi 0, %s76
      %s78 = sphi 0, %s76
      %s79 = sphi 0, %s78
      %s93 = sphi 0, %s79
      %s97 = sphi 0, %s97
      %s99 = sphi 0, %s97
      %s100 = sphi 0, %s99
      %s114 = sphi 0, %s100
      %s118 = sphi 0, %s118
      %s120 = sphi 0, %s118
      %s121 = sphi 0, %s120
      %s135 = sphi 0, %s121
      %s139 = sphi 0, %s139
      %s141 = sphi 0, %s139
      %s142 = sphi 0, %s141
      %s156 = sphi 0, %s142
      %s160 = sphi 0, %s160
      %s162 = sphi 0, %s160
      %s163 = sphi 0, %s162
      %s177 = sphi 0, %s163
      %s181 = sphi 0, %s181
      %s183 = sphi 0, %s181
      %s184 = sphi 0, %s183
      %s198 = sphi 0, %s184
      %s202 = sphi 0, %s202
      %s204 = sphi 0, %s202
      %s205 = sphi 0, %s204
      %s219 = sphi 0, %s205
      %s223 = sphi 0, %s223
      %s225 = sphi 0, %s223
      %s226 = sphi 0, %s225
      %s240 = sphi 0, %s226
      %s246 = sphi 0, %s248
      %s249 = sphi 0, %s246
      %s250 = sphi 0, %s249
      %s266 = sphi 0, %s250
    $region4: #{tpu_custom_call.1} parent=1 // loop_header_branch
      %24 = sbr.rel (%p22) target = $region8
    $region5: #{tpu_custom_call.1} parent=1 // loop_body
      %s26 = ssub.s32 %s21, 1
      %s27 = ssub.s32 %s21, 2
      %s28 = sadd.s32 %s21, 1
      %s29 = ssub.s32 %s21, %s28
      %p30 = scmp.eq.s32.totalorder %s29, 0
      %s32 = sadd.s32 %s31, 1
      %s33 = scalar_select %p30, %s31, %s32
      %p36 = pneg %p30
      %p37 = scmp.eq.s32.totalorder %s21, 1
      %p38 = por %p36, %p37
      %p39 = scmp.ne.s32.totalorder %s31, %s34
      %p40 = scmp.eq.s32.totalorder %s21, 0
      %p41 = por %p39, %p40
      %p42 = scmp.ne.s32.totalorder %s31, %s34
      %p43 = scmp.eq.s32.totalorder %s26, 1
      %p44 = por %p42, %p43
      %p45 = scmp.ne.s32.totalorder %s34, %s35
      %p46 = scmp.eq.s32.totalorder %s26, 0
      %p47 = por %p45, %p46
      %p48 = scmp.ne.s32.totalorder %s34, %s35
      %p49 = scmp.eq.s32.totalorder %s27, 1
      %p50 = por %p48, %p49
      %p52 = scmp.ne.s32.totalorder %s35, %s51
      %p53 = scmp.eq.s32.totalorder %s27, 0
      %p54 = por %p52, %p53
      %s56 = sadd.s32 %s55, 1
      %p59 = scmp.eq.s32.totalorder %s21, 1
      %p60 = scmp.ne.s32.totalorder %s55, %s57
      %p61 = scmp.eq.s32.totalorder %s21, 0
      %p62 = por %p60, %p61
      %p63 = scmp.ne.s32.totalorder %s55, %s57
      %p64 = scmp.eq.s32.totalorder %s26, 1
      %p65 = por %p63, %p64
      %p66 = scmp.ne.s32.totalorder %s57, %s58
      %p67 = scmp.eq.s32.totalorder %s26, 0
      %p68 = por %p66, %p67
      %p69 = scmp.ne.s32.totalorder %s57, %s58
      %p70 = scmp.eq.s32.totalorder %s27, 1
      %p71 = por %p69, %p70
      %p73 = scmp.ne.s32.totalorder %s58, %s72
      %p74 = scmp.eq.s32.totalorder %s27, 0
      %p75 = por %p73, %p74
      %s77 = sadd.s32 %s76, 1
      %p80 = scmp.eq.s32.totalorder %s21, 1
      %p81 = scmp.ne.s32.totalorder %s76, %s78
      %p82 = scmp.eq.s32.totalorder %s21, 0
      %p83 = por %p81, %p82
      %p84 = scmp.ne.s32.totalorder %s76, %s78
      %p85 = scmp.eq.s32.totalorder %s26, 1
      %p86 = por %p84, %p85
      %p87 = scmp.ne.s32.totalorder %s78, %s79
      %p88 = scmp.eq.s32.totalorder %s26, 0
      %p89 = por %p87, %p88
      %p90 = scmp.ne.s32.totalorder %s78, %s79
      %p91 = scmp.eq.s32.totalorder %s27, 1
      %p92 = por %p90, %p91
      %p94 = scmp.ne.s32.totalorder %s79, %s93
      %p95 = scmp.eq.s32.totalorder %s27, 0
      %p96 = por %p94, %p95
      %s98 = sadd.s32 %s97, 1
      %p101 = scmp.eq.s32.totalorder %s21, 1
      %p102 = scmp.ne.s32.totalorder %s97, %s99
      %p103 = scmp.eq.s32.totalorder %s21, 0
      %p104 = por %p102, %p103
      %p105 = scmp.ne.s32.totalorder %s97, %s99
      %p106 = scmp.eq.s32.totalorder %s26, 1
      %p107 = por %p105, %p106
      %p108 = scmp.ne.s32.totalorder %s99, %s100
      %p109 = scmp.eq.s32.totalorder %s26, 0
      %p110 = por %p108, %p109
      %p111 = scmp.ne.s32.totalorder %s99, %s100
      %p112 = scmp.eq.s32.totalorder %s27, 1
      %p113 = por %p111, %p112
      %p115 = scmp.ne.s32.totalorder %s100, %s114
      %p116 = scmp.eq.s32.totalorder %s27, 0
      %p117 = por %p115, %p116
      %s119 = sadd.s32 %s118, 1
      %p122 = scmp.eq.s32.totalorder %s21, 1
      %p123 = scmp.ne.s32.totalorder %s118, %s120
      %p124 = scmp.eq.s32.totalorder %s21, 0
      %p125 = por %p123, %p124
      %p126 = scmp.ne.s32.totalorder %s118, %s120
      %p127 = scmp.eq.s32.totalorder %s26, 1
      %p128 = por %p126, %p127
      %p129 = scmp.ne.s32.totalorder %s120, %s121
      %p130 = scmp.eq.s32.totalorder %s26, 0
      %p131 = por %p129, %p130
      %p132 = scmp.ne.s32.totalorder %s120, %s121
      %p133 = scmp.eq.s32.totalorder %s27, 1
      %p134 = por %p132, %p133
      %p136 = scmp.ne.s32.totalorder %s121, %s135
      %p137 = scmp.eq.s32.totalorder %s27, 0
      %p138 = por %p136, %p137
      %s140 = sadd.s32 %s139, 1
      %p143 = scmp.eq.s32.totalorder %s21, 1
      %p144 = scmp.ne.s32.totalorder %s139, %s141
      %p145 = scmp.eq.s32.totalorder %s21, 0
      %p146 = por %p144, %p145
      %p147 = scmp.ne.s32.totalorder %s139, %s141
      %p148 = scmp.eq.s32.totalorder %s26, 1
      %p149 = por %p147, %p148
      %p150 = scmp.ne.s32.totalorder %s141, %s142
      %p151 = scmp.eq.s32.totalorder %s26, 0
      %p152 = por %p150, %p151
      %p153 = scmp.ne.s32.totalorder %s141, %s142
      %p154 = scmp.eq.s32.totalorder %s27, 1
      %p155 = por %p153, %p154
      %p157 = scmp.ne.s32.totalorder %s142, %s156
      %p158 = scmp.eq.s32.totalorder %s27, 0
      %p159 = por %p157, %p158
      %s161 = sadd.s32 %s160, 1
      %p164 = scmp.eq.s32.totalorder %s21, 1
      %p165 = scmp.ne.s32.totalorder %s160, %s162
      %p166 = scmp.eq.s32.totalorder %s21, 0
      %p167 = por %p165, %p166
      %p168 = scmp.ne.s32.totalorder %s160, %s162
      %p169 = scmp.eq.s32.totalorder %s26, 1
      %p170 = por %p168, %p169
      %p171 = scmp.ne.s32.totalorder %s162, %s163
      %p172 = scmp.eq.s32.totalorder %s26, 0
      %p173 = por %p171, %p172
      %p174 = scmp.ne.s32.totalorder %s162, %s163
      %p175 = scmp.eq.s32.totalorder %s27, 1
      %p176 = por %p174, %p175
      %p178 = scmp.ne.s32.totalorder %s163, %s177
      %p179 = scmp.eq.s32.totalorder %s27, 0
      %p180 = por %p178, %p179
      %s182 = sadd.s32 %s181, 1
      %p185 = scmp.eq.s32.totalorder %s21, 1
      %p186 = scmp.ne.s32.totalorder %s181, %s183
      %p187 = scmp.eq.s32.totalorder %s21, 0
      %p188 = por %p186, %p187
      %p189 = scmp.ne.s32.totalorder %s181, %s183
      %p190 = scmp.eq.s32.totalorder %s26, 1
      %p191 = por %p189, %p190
      %p192 = scmp.ne.s32.totalorder %s183, %s184
      %p193 = scmp.eq.s32.totalorder %s26, 0
      %p194 = por %p192, %p193
      %p195 = scmp.ne.s32.totalorder %s183, %s184
      %p196 = scmp.eq.s32.totalorder %s27, 1
      %p197 = por %p195, %p196
      %p199 = scmp.ne.s32.totalorder %s184, %s198
      %p200 = scmp.eq.s32.totalorder %s27, 0
      %p201 = por %p199, %p200
      %s203 = sadd.s32 %s202, 1
      %p206 = scmp.eq.s32.totalorder %s21, 1
      %p207 = scmp.ne.s32.totalorder %s202, %s204
      %p208 = scmp.eq.s32.totalorder %s21, 0
      %p209 = por %p207, %p208
      %p210 = scmp.ne.s32.totalorder %s202, %s204
      %p211 = scmp.eq.s32.totalorder %s26, 1
      %p212 = por %p210, %p211
      %p213 = scmp.ne.s32.totalorder %s204, %s205
      %p214 = scmp.eq.s32.totalorder %s26, 0
      %p215 = por %p213, %p214
      %p216 = scmp.ne.s32.totalorder %s204, %s205
      %p217 = scmp.eq.s32.totalorder %s27, 1
      %p218 = por %p216, %p217
      %p220 = scmp.ne.s32.totalorder %s205, %s219
      %p221 = scmp.eq.s32.totalorder %s27, 0
      %p222 = por %p220, %p221
      %s224 = sadd.s32 %s223, 1
      %p227 = scmp.eq.s32.totalorder %s21, 1
      %p228 = scmp.ne.s32.totalorder %s223, %s225
      %p229 = scmp.eq.s32.totalorder %s21, 0
      %p230 = por %p228, %p229
      %p231 = scmp.ne.s32.totalorder %s223, %s225
      %p232 = scmp.eq.s32.totalorder %s26, 1
      %p233 = por %p231, %p232
      %p234 = scmp.ne.s32.totalorder %s225, %s226
      %p235 = scmp.eq.s32.totalorder %s26, 0
      %p236 = por %p234, %p235
      %p237 = scmp.ne.s32.totalorder %s225, %s226
      %p238 = scmp.eq.s32.totalorder %s27, 1
      %p239 = por %p237, %p238
      %p241 = scmp.ne.s32.totalorder %s226, %s240
      %p242 = scmp.eq.s32.totalorder %s27, 0
      %p243 = por %p241, %p242
      %s244 = ssub.s32 %s21, %s28
      %p245 = scmp.eq.s32.totalorder %s244, 0
      %s247 = sadd.s32 %s246, 1
      %s248 = scalar_select %p245, %s246, %s247
      %p251 = pneg %p245
      %p252 = scmp.eq.s32.totalorder %s21, 1
      %p253 = por %p251, %p252
      %p254 = scmp.ne.s32.totalorder %s246, %s249
      %p255 = scmp.eq.s32.totalorder %s21, 0
      %p256 = por %p254, %p255
      %p257 = scmp.ne.s32.totalorder %s246, %s249
      %p258 = scmp.eq.s32.totalorder %s26, 1
      %p259 = por %p257, %p258
      %p260 = scmp.ne.s32.totalorder %s249, %s250
      %p261 = scmp.eq.s32.totalorder %s26, 0
      %p262 = por %p260, %p261
      %p263 = scmp.ne.s32.totalorder %s249, %s250
      %p264 = scmp.eq.s32.totalorder %s27, 1
      %p265 = por %p263, %p264
      %p267 = scmp.ne.s32.totalorder %s250, %s266
      %p268 = scmp.eq.s32.totalorder %s27, 0
      %p269 = por %p267, %p268
      %p270 = scmp.le.s32.totalorder 1, %s21
      %p271 = scmp.lt.s32.totalorder %s21, 3
      %p272 = pnand %p270, %p271
      %p273 = pneg %p272
      // Predicated region
      $region9: #{tpu_custom_call.1} parent=5 // pred_check
        _
      $region10: #{tpu_custom_call.1} parent=5 // pred_check_branch
        %275 = sbr.rel (%p272) target = $region12
      $region11: #{tpu_custom_call.1} parent=5 // pred_region
        %s276 = ssub.s32 %s21, 1
        // Predicated region
        $region13: #{tpu_custom_call.1} parent=11 // pred_check
          %p277 = pneg %p68
        $region14: #{tpu_custom_call.1} parent=11 // pred_check_branch
          %279 = sbr.rel (%p277) target = $region16
        $region15: #{tpu_custom_call.1} parent=11 // pred_region
          _
        $region16: #{tpu_custom_call.1} parent=11 // pred_fallthru
          _
        // Predicated region
        $region17: #{tpu_custom_call.1} parent=11 // pred_check
          %p280 = pneg %p89
        $region18: #{tpu_custom_call.1} parent=11 // pred_check_branch
          %282 = sbr.rel (%p280) target = $region20
        $region19: #{tpu_custom_call.1} parent=11 // pred_region
          _
        $region20: #{tpu_custom_call.1} parent=11 // pred_fallthru
          _
        // Predicated region
        $region21: #{tpu_custom_call.1} parent=11 // pred_check
          %p283 = pneg %p110
        $region22: #{tpu_custom_call.1} parent=11 // pred_check_branch
          %285 = sbr.rel (%p283) target = $region24
        $region23: #{tpu_custom_call.1} parent=11 // pred_region
          %s287 = ssub.s32 256, 256
          %288 = vsyncadd [#allocation5], %s287
          %s289 = sshll.u32 [#allocation4], 4
          %s290 = int_to_ptr.vmem [resolvable:$true] %s289
          %295 = dma.hbm_to_vmem [thread:$0]  %s3, 256, %s290, [#allocation5], 64, 64, 4
        $region24: #{tpu_custom_call.1} parent=11 // pred_fallthru
          _
        // Predicated region
        $region25: #{tpu_custom_call.1} parent=11 // pred_check
          %p296 = pneg %p131
        $region26: #{tpu_custom_call.1} parent=11 // pred_check_branch
          %298 = sbr.rel (%p296) target = $region28
        $region27: #{tpu_custom_call.1} parent=11 // pred_region
          _
        $region28: #{tpu_custom_call.1} parent=11 // pred_fallthru
          _
        // Predicated region
        $region29: #{tpu_custom_call.1} parent=11 // pred_check
          %p299 = pneg %p152
        $region30: #{tpu_custom_call.1} parent=11 // pred_check_branch
          %301 = sbr.rel (%p299) target = $region32
        $region31: #{tpu_custom_call.1} parent=11 // pred_region
          %s303 = ssub.s32 256, 256
          %304 = vsyncadd [#allocation5], %s303
          %s305 = sshll.u32 [#allocation6], 4
          %s306 = int_to_ptr.vmem [resolvable:$true] %s305
          %311 = dma.hbm_to_vmem [thread:$0]  %s5, 256, %s306, [#allocation5], 64, 64, 4
        $region32: #{tpu_custom_call.1} parent=11 // pred_fallthru
          _
        // Predicated region
        $region33: #{tpu_custom_call.1} parent=11 // pred_check
          %p312 = pneg %p173
        $region34: #{tpu_custom_call.1} parent=11 // pred_check_branch
          %314 = sbr.rel (%p312) target = $region36
        $region35: #{tpu_custom_call.1} parent=11 // pred_region
          _
        $region36: #{tpu_custom_call.1} parent=11 // pred_fallthru
          _
        // Predicated region
        $region37: #{tpu_custom_call.1} parent=11 // pred_check
          %p315 = pneg %p194
        $region38: #{tpu_custom_call.1} parent=11 // pred_check_branch
          %317 = sbr.rel (%p315) target = $region40
        $region39: #{tpu_custom_call.1} parent=11 // pred_region
          %s319 = ssub.s32 256, 256
          %320 = vsyncadd [#allocation8], %s319
          %s321 = sshll.u32 [#allocation7], 4
          %s322 = int_to_ptr.vmem [resolvable:$true] %s321
          %327 = dma.hbm_to_vmem [thread:$0]  %s7, 256, %s322, [#allocation8], 64, 64, 4
        $region40: #{tpu_custom_call.1} parent=11 // pred_fallthru
          _
        // Predicated region
        $region41: #{tpu_custom_call.1} parent=11 // pred_check
          %p328 = pneg %p215
        $region42: #{tpu_custom_call.1} parent=11 // pred_check_branch
          %330 = sbr.rel (%p328) target = $region44
        $region43: #{tpu_custom_call.1} parent=11 // pred_region
          _
        $region44: #{tpu_custom_call.1} parent=11 // pred_fallthru
          _
        // Predicated region
        $region45: #{tpu_custom_call.1} parent=11 // pred_check
          %p331 = pneg %p236
        $region46: #{tpu_custom_call.1} parent=11 // pred_check_branch
          %333 = sbr.rel (%p331) target = $region48
        $region47: #{tpu_custom_call.1} parent=11 // pred_region
          _
        $region48: #{tpu_custom_call.1} parent=11 // pred_fallthru
          _
      $region12: #{tpu_custom_call.1} parent=5 // pred_fallthru
        _
      %p334 = scmp.lt.s32.totalorder %s21, 2
      // Predicated region
      $region49: #{tpu_custom_call.1} parent=5 // pred_check
        %p335 = pneg %p334
      $region50: #{tpu_custom_call.1} parent=5 // pred_check_branch
        %337 = sbr.rel (%p335) target = $region52
      $region51: #{tpu_custom_call.1} parent=5 // pred_region
        // Predicated region
        $region53: #{tpu_custom_call.1} parent=51 // pred_check
          %p338 = pneg %p41
        $region54: #{tpu_custom_call.1} parent=51 // pred_check_branch
          %340 = sbr.rel (%p338) target = $region56
        $region55: #{tpu_custom_call.1} parent=51 // pred_region
          %s341 = sand.u32 %s31, 1
          %s342 = scalar_lea.sflag [#allocation3], %s341
          %s343 = sand.u32 %s31, 1
          %s344 = smul.addr %s343, 8
          %s345 = scalar_lea.vmem [#allocation2], %s344
          %s347 = ssub.s32 128, 128
          %348 = vsyncadd %s342, %s347
          %s349 = smul.addr %s21, 128
          %s350 = scalar_lea.hbm %s0, %s349
          %s352 = sshll.u32 %s345, 4
          %s353 = int_to_ptr.vmem [resolvable:$true] %s352
          %355 = dma.hbm_to_vmem [thread:$0]  %s350, 128, %s353, %s342
        $region56: #{tpu_custom_call.1} parent=51 // pred_fallthru
          _
      $region52: #{tpu_custom_call.1} parent=5 // pred_fallthru
        _
      %p356 = scmp.le.s32.totalorder 1, %s21
      %p357 = scmp.lt.s32.totalorder %s21, 3
      %p358 = pnand %p356, %p357
      %p359 = pneg %p358
      // Predicated region
      $region57: #{tpu_custom_call.1} parent=5 // pred_check
        _
      $region58: #{tpu_custom_call.1} parent=5 // pred_check_branch
        %361 = sbr.rel (%p358) target = $region60
      $region59: #{tpu_custom_call.1} parent=5 // pred_region
        %s362 = ssub.s32 %s21, 1
        %s363 = sand.u32 %s34, 1
        %s364 = scalar_lea.sflag [#allocation3], %s363
        %s365 = sand.u32 %s34, 1
        %s366 = smul.addr %s365, 8
        %s367 = scalar_lea.vmem [#allocation2], %s366
        // Predicated region
        $region61: #{tpu_custom_call.1} parent=59 // pred_check
          %p368 = pneg %p47
        $region62: #{tpu_custom_call.1} parent=59 // pred_check_branch
          %370 = sbr.rel (%p368) target = $region64
        $region63: #{tpu_custom_call.1} parent=59 // pred_region
          %371 = dma.done %s364, 128
        $region64: #{tpu_custom_call.1} parent=59 // pred_fallthru
          _
        // Predicated region
        $region65: #{tpu_custom_call.1} parent=59 // pred_check
          %p372 = pneg %p110
        $region66: #{tpu_custom_call.1} parent=59 // pred_check_branch
          %374 = sbr.rel (%p372) target = $region68
        $region67: #{tpu_custom_call.1} parent=59 // pred_region
          %375 = dma.done [#allocation5], 256
        $region68: #{tpu_custom_call.1} parent=59 // pred_fallthru
          _
        // Predicated region
        $region69: #{tpu_custom_call.1} parent=59 // pred_check
          %p376 = pneg %p152
        $region70: #{tpu_custom_call.1} parent=59 // pred_check_branch
          %378 = sbr.rel (%p376) target = $region72
        $region71: #{tpu_custom_call.1} parent=59 // pred_region
          %379 = dma.done [#allocation5], 256
        $region72: #{tpu_custom_call.1} parent=59 // pred_fallthru
          _
        // Predicated region
        $region73: #{tpu_custom_call.1} parent=59 // pred_check
          %p380 = pneg %p194
        $region74: #{tpu_custom_call.1} parent=59 // pred_check_branch
          %382 = sbr.rel (%p380) target = $region76
        $region75: #{tpu_custom_call.1} parent=59 // pred_region
          %383 = dma.done [#allocation8], 256
        $region76: #{tpu_custom_call.1} parent=59 // pred_fallthru
          _
        %s384 = sand.u32 %s34, 1
        %s385 = scalar_lea.sflag [#allocation3], %s384
        %s386 = sand.u32 %s34, 1
        %s387 = smul.addr %s386, 8
        %s388 = scalar_lea.vmem [#allocation2], %s387
        %p389 = pneg %p47
        %p390 = pneg %p44
        %p391 = pneg %p68
        %p392 = pneg %p65
        %p393 = pneg %p89
        %p394 = pneg %p86
        %p395 = pneg %p110
        %p396 = pneg %p107
        %p397 = pneg %p131
        %p398 = pneg %p128
        %p399 = pneg %p152
        %p400 = pneg %p149
        %p401 = pneg %p173
        %p402 = pneg %p170
        %p403 = pneg %p194
        %p404 = pneg %p191
        %p405 = pneg %p215
        %p406 = pneg %p212
        %p407 = pneg %p236
        %p408 = pneg %p233
        %p409 = pneg %p262
        %p410 = pneg %p259
        %p411 = scmp.lt.s32.totalorder %s26, 1
        %s412 = scalar_select %p411, %s26, 1
        %s413 = smul.addr %s412, 8
        %s414 = scalar_lea.vmem %s10, %s413
        %p415 = scmp.lt.s32.totalorder %s26, 1
        %s416 = scalar_select %p415, %s26, 1
        %s417 = smul.addr %s416, 8
        %s418 = scalar_lea.vmem %s10, %s417
        %v420 = vld [vmem:[%s367] sm:$0xff]
        %vm421 = vcmask 261120
        %v422 = vsel %vm421, %v420, 0.0
        %423 = vadd.xlane.f32.xlu0 %v422
        %v424 = vpop.xlane.xlu0 %423
        %v425 = vrcp.pop 32.0
        %v426 = vmul.f32 %v424, %v425
        %v427 = vsub.f32 %v420, %v426
        %v428 = vmul.f32 %v427, %v427
        %v429 = vsel %vm421, %v428, 0.0
        %430 = vadd.xlane.f32.xlu0 %v429
        %v431 = vpop.xlane.xlu0 %430
        %v432 = vmul.f32 %v431, %v425
        %v433 = vadd.f32 %v432, 1e-05
        %v434 = vrsqrt.pop %v433
        %v435 = vmul.f32 %v427, %v434
        %v436 = vld [vmem:[%s1] sm:$0x1]
        %v438 = vlaneseq
        %v439 = vshrl.u32 %v438, 7
        %v440 = vsub.s32 0, %v439
        %v441 = vrot.slane %v436, %v440
        %v443 = vmul.f32 %v435, %v441
        %v444 = vld [vmem:[%s2] sm:$0x1]
        %v446 = vlaneseq
        %v447 = vshrl.u32 %v446, 7
        %v448 = vsub.s32 0, %v447
        %v449 = vrot.slane %v444, %v448
        %v451 = vadd.f32 %v443, %v449
        %v452 = vpack.c.bf16 %v451, %v451
        %v453 = vld [vmem:[#allocation4] sm:$0xf]
        %v454 = vld [vmem:[#allocation4 + $0x4] sm:$0xf]
        %v455 = vld [vmem:[#allocation4 + $0x8] sm:$0xf]
        %v456 = vld [vmem:[#allocation4 + $0xc] sm:$0xf]
        %v457 = vld [vmem:[%s4] sm:$0x1]
        %v459 = vlaneseq
        %v460 = vshrl.u32 %v459, 7
        %v461 = vsub.s32 0, %v460
        %v462 = vrot.slane %v457, %v461
        %v468 = vunpack.c.l.b16 %v453
        %v469 = vunpack.c.l.b16 %v454
        %v470 = vunpack.c.l.b16 %v455
        %v471 = vunpack.c.l.b16 %v456
        %v472 = vpack.c.b16 %v469, %v468
        %v473 = vpack.c.b16 %v471, %v470
        %v477 = vsel %vm421, %v452, 0
        %479 = vmatprep.subr.bf16.mxu0 0
        %480 = vmatpush1.bf16.msra.mxu0 0
        %481 = vmatprep.subr.bf16.mxu0 0
        %482 = vmatpush1.bf16.msra.mxu0 0
        %483 = vmatprep.subr.bf16.mxu0 0
        %484 = vmatpush1.bf16.msra.mxu0 0
        %485 = vmatprep.subr.bf16.mxu0 0
        %486 = vmatpush1.bf16.msra.mxu0 0
        %487 = vmatprep.subr.bf16.mxu0 0
        %488 = vmatpush1.bf16.msra.mxu0 0
        %489 = vmatprep.subr.bf16.mxu0 0
        %490 = vmatpush1.bf16.msra.mxu0 0
        %491 = vmatprep.subr.bf16.mxu0 0
        %492 = vmatpush1.bf16.msra.mxu0 %v473
        %493 = vmatprep.subr.bf16.mxu0 0
        %494 = vmatpush1.bf16.msra.mxu0 %v472
        %495 = vmatprep.subr.bf16.mxu0 0
        %496 = vmatpush2.bf16.msra.mxu0 0
        %497 = vmatprep.subr.bf16.mxu0 0
        %498 = vmatpush2.bf16.msra.mxu0 0
        %499 = vmatprep.subr.bf16.mxu0 0
        %500 = vmatpush2.bf16.msra.mxu0 0
        %501 = vmatprep.subr.bf16.mxu0 0
        %502 = vmatpush2.bf16.msra.mxu0 0
        %503 = vmatprep.subr.bf16.mxu0 0
        %504 = vmatpush2.bf16.msra.mxu0 0
        %505 = vmatprep.subr.bf16.mxu0 0
        %506 = vmatpush2.bf16.msra.mxu0 0
        %507 = vmatprep.subr.bf16.mxu0 0
        %508 = vmatpush2.bf16.msra.mxu0 0
        %509 = vmatprep.subr.bf16.mxu0 0
        %510 = vmatpush2.bf16.msra.mxu0 0
        %511 = vmatprep.mubr.bf16.mxu0 0
        %512 = vmatmul.mubr.bf16.gmra.mxu0 %v477
        %v513 = vpop.f32.mrf.mxu0
        %v514 = vadd.f32 %v462, %v513
        %v515 = vpop.f32.mrf.mxu0
        %v516 = vpop.f32.mrf.mxu0
        %v517 = vpop.f32.mrf.mxu0
        %518 = vdwg.mxu0
        %v519 = vmax.f32 %v514, 0.0
        %v520 = vpack.c.bf16 %v519, %v519
        %v521 = vld [vmem:[#allocation6] sm:$0xf]
        %v522 = vld [vmem:[#allocation6 + $0x4] sm:$0xf]
        %v523 = vld [vmem:[#allocation6 + $0x8] sm:$0xf]
        %v524 = vld [vmem:[#allocation6 + $0xc] sm:$0xf]
        %v525 = vld [vmem:[%s6] sm:$0x1]
        %v527 = vlaneseq
        %v528 = vshrl.u32 %v527, 7
        %v529 = vsub.s32 0, %v528
        %v530 = vrot.slane %v525, %v529
        %v536 = vunpack.c.l.b16 %v521
        %v537 = vunpack.c.l.b16 %v522
        %v538 = vunpack.c.l.b16 %v523
        %v539 = vunpack.c.l.b16 %v524
        %v540 = vpack.c.b16 %v537, %v536
        %v541 = vpack.c.b16 %v539, %v538
        %v545 = vsel %vm421, %v520, 0
        %547 = vmatprep.subr.bf16.mxu0 0
        %548 = vmatpush1.bf16.msra.mxu0 0
        %549 = vmatprep.subr.bf16.mxu0 0
        %550 = vmatpush1.bf16.msra.mxu0 0
        %551 = vmatprep.subr.bf16.mxu0 0
        %552 = vmatpush1.bf16.msra.mxu0 0
        %553 = vmatprep.subr.bf16.mxu0 0
        %554 = vmatpush1.bf16.msra.mxu0 0
        %555 = vmatprep.subr.bf16.mxu0 0
        %556 = vmatpush1.bf16.msra.mxu0 0
        %557 = vmatprep.subr.bf16.mxu0 0
        %558 = vmatpush1.bf16.msra.mxu0 0
        %559 = vmatprep.subr.bf16.mxu0 0
        %560 = vmatpush1.bf16.msra.mxu0 %v541
        %561 = vmatprep.subr.bf16.mxu0 0
        %562 = vmatpush1.bf16.msra.mxu0 %v540
        %563 = vmatprep.subr.bf16.mxu0 0
        %564 = vmatpush2.bf16.msra.mxu0 0
        %565 = vmatprep.subr.bf16.mxu0 0
        %566 = vmatpush2.bf16.msra.mxu0 0
        %567 = vmatprep.subr.bf16.mxu0 0
        %568 = vmatpush2.bf16.msra.mxu0 0
        %569 = vmatprep.subr.bf16.mxu0 0
        %570 = vmatpush2.bf16.msra.mxu0 0
        %571 = vmatprep.subr.bf16.mxu0 0
        %572 = vmatpush2.bf16.msra.mxu0 0
        %573 = vmatprep.subr.bf16.mxu0 0
        %574 = vmatpush2.bf16.msra.mxu0 0
        %575 = vmatprep.subr.bf16.mxu0 0
        %576 = vmatpush2.bf16.msra.mxu0 0
        %577 = vmatprep.subr.bf16.mxu0 0
        %578 = vmatpush2.bf16.msra.mxu0 0
        %579 = vmatprep.mubr.bf16.mxu0 0
        %580 = vmatmul.mubr.bf16.gmra.mxu0 %v545
        %v581 = vpop.f32.mrf.mxu0
        %v582 = vadd.f32 %v530, %v581
        %v583 = vpop.f32.mrf.mxu0
        %v584 = vpop.f32.mrf.mxu0
        %v585 = vpop.f32.mrf.mxu0
        %586 = vdwg.mxu0
        %v587 = vmax.f32 %v582, 0.0
        %v588 = vpack.c.bf16 %v587, %v587
        %v589 = vld [vmem:[#allocation7] sm:$0xf]
        %v590 = vld [vmem:[#allocation7 + $0x4] sm:$0xf]
        %v591 = vld [vmem:[#allocation7 + $0x8] sm:$0xf]
        %v592 = vld [vmem:[#allocation7 + $0xc] sm:$0xf]
        %v593 = vld [vmem:[%s8] sm:$0x1]
        %v595 = vlaneseq
        %v596 = vshrl.u32 %v595, 7
        %v597 = vsub.s32 0, %v596
        %v598 = vrot.slane %v593, %v597
        %v604 = vunpack.c.l.b16 %v589
        %v605 = vunpack.c.l.b16 %v590
        %v606 = vunpack.c.l.b16 %v591
        %v607 = vunpack.c.l.b16 %v592
        %v608 = vpack.c.b16 %v605, %v604
        %v609 = vpack.c.b16 %v607, %v606
        %v613 = vsel %vm421, %v588, 0
        %615 = vmatprep.subr.bf16.mxu0 0
        %616 = vmatpush1.bf16.msra.mxu0 0
        %617 = vmatprep.subr.bf16.mxu0 0
        %618 = vmatpush1.bf16.msra.mxu0 0
        %619 = vmatprep.subr.bf16.mxu0 0
        %620 = vmatpush1.bf16.msra.mxu0 0
        %621 = vmatprep.subr.bf16.mxu0 0
        %622 = vmatpush1.bf16.msra.mxu0 0
        %623 = vmatprep.subr.bf16.mxu0 0
        %624 = vmatpush1.bf16.msra.mxu0 0
        %625 = vmatprep.subr.bf16.mxu0 0
        %626 = vmatpush1.bf16.msra.mxu0 0
        %627 = vmatprep.subr.bf16.mxu0 0
        %628 = vmatpush1.bf16.msra.mxu0 %v609
        %629 = vmatprep.subr.bf16.mxu0 0
        %630 = vmatpush1.bf16.msra.mxu0 %v608
        %631 = vmatprep.subr.bf16.mxu0 0
        %632 = vmatpush2.bf16.msra.mxu0 0
        %633 = vmatprep.subr.bf16.mxu0 0
        %634 = vmatpush2.bf16.msra.mxu0 0
        %635 = vmatprep.subr.bf16.mxu0 0
        %636 = vmatpush2.bf16.msra.mxu0 0
        %637 = vmatprep.subr.bf16.mxu0 0
        %638 = vmatpush2.bf16.msra.mxu0 0
        %639 = vmatprep.subr.bf16.mxu0 0
        %640 = vmatpush2.bf16.msra.mxu0 0
        %641 = vmatprep.subr.bf16.mxu0 0
        %642 = vmatpush2.bf16.msra.mxu0 0
        %643 = vmatprep.subr.bf16.mxu0 0
        %644 = vmatpush2.bf16.msra.mxu0 0
        %645 = vmatprep.subr.bf16.mxu0 0
        %646 = vmatpush2.bf16.msra.mxu0 0
        %647 = vmatprep.mubr.bf16.mxu0 0
        %648 = vmatmul.mubr.bf16.gmra.mxu0 %v613
        %v649 = vpop.f32.mrf.mxu0
        %v650 = vadd.f32 %v598, %v649
        %v651 = vpop.f32.mrf.mxu0
        %v652 = vpop.f32.mrf.mxu0
        %v653 = vpop.f32.mrf.mxu0
        %654 = vdwg.mxu0
        %vm655 = vcmask 408576
        %v656 = vsel %vm655, %v650, -inf
        %657 = vmax.xlane.f32.xlu0 %v656
        %v658 = vpop.xlane.xlu0 %657
        %v659 = vsub.f32 %v650, %v658
        %v660 = vmul.f32 %v659, 1.442695
        %v661 = vpow.pop %v660
        %v662 = vld [vmem:[%s9] sm:$0x1]
        %v664 = vlaneseq
        %v665 = vshrl.u32 %v664, 7
        %v666 = vsub.s32 0, %v665
        %v667 = vrot.slane %v662, %v666
        %v669 = vmul.f32 %v661, %v667
        %v670 = vsel %vm655, %v669, 0.0
        %671 = vadd.xlane.f32.xlu0 %v670
        %v672 = vpop.xlane.xlu0 %671
        %v673 = vsel %vm655, %v661, 0.0
        %674 = vadd.xlane.f32.xlu0 %v673
        %v675 = vpop.xlane.xlu0 %674
        %v676 = vrcp.pop %v675
        %v677 = vmul.f32 %v672, %v676
        %vm678 = vcmask 7168
        %679 = vst.msk [vmem:[%s418] sm:$0xff] %vm678, %v677
        %p680 = scmp.lt.s32.totalorder %s26, 1
        %s681 = scalar_select %p680, %s26, 1
        %s682 = smul.addr %s681, 8
        %s683 = scalar_lea.vmem %s10, %s682
        // Predicated region
        $region77: #{tpu_custom_call.1} parent=59 // pred_check
          %p684 = pneg %p259
        $region78: #{tpu_custom_call.1} parent=59 // pred_check_branch
          %686 = sbr.rel (%p684) target = $region80
        $region79: #{tpu_custom_call.1} parent=59 // pred_region
          _
        $region80: #{tpu_custom_call.1} parent=59 // pred_fallthru
          _
      $region60: #{tpu_custom_call.1} parent=5 // pred_fallthru
        _
      %p687 = scmp.le.s32.totalorder 2, %s21
      // Predicated region
      $region81: #{tpu_custom_call.1} parent=5 // pred_check
        %p688 = pneg %p687
      $region82: #{tpu_custom_call.1} parent=5 // pred_check_branch
        %690 = sbr.rel (%p688) target = $region84
      $region83: #{tpu_custom_call.1} parent=5 // pred_region
        %s691 = ssub.s32 %s21, 2
        // Predicated region
        $region85: #{tpu_custom_call.1} parent=83 // pred_check
          %p692 = pneg %p265
        $region86: #{tpu_custom_call.1} parent=83 // pred_check_branch
          %694 = sbr.rel (%p692) target = $region88
        $region87: #{tpu_custom_call.1} parent=83 // pred_region
          %p695 = scmp.lt.s32.totalorder %s27, 1
          %s696 = scalar_select %p695, %s27, 1
          %s697 = smul.addr %s696, 8
          %s698 = scalar_lea.vmem %s10, %s697
        $region88: #{tpu_custom_call.1} parent=83 // pred_fallthru
          _
      $region84: #{tpu_custom_call.1} parent=5 // pred_fallthru
        _
    $region6: #{tpu_custom_call.1} parent=1 // loop_footer
      %s25 = sadd.s32 1, %s21
    $region7: #{tpu_custom_call.1} parent=1 // loop_footer_branch
      %20 = sbr.rel target = $region3
    $region8: #{tpu_custom_call.1} parent=1 // loop_exit
      _
    %699 = vsyncpa [#allocation3], 1
    %s700 = scalar_lea.sflag [#allocation3], 1
    %701 = vsyncpa %s700, 1
    %702 = vsyncpa [#allocation5], 1
    %703 = vsyncpa [#allocation8], 1

</llo_original>
